<compile_context>
chip_gen: v5e
topology: v5e:2x2
jax: 0.10.0
libtpu: 0.0.40
codegen_flags: <defaults>
</compile_context>

<pallas_src>
import functools

import jax
import jax.numpy as jnp
from jax import lax
from jax.experimental import pallas as pl
from jax.experimental.pallas import tpu as pltpu

EPS = 1e-6
_MIB = 1024 * 1024


def _round_up(n, m):
    return ((n + m - 1) // m) * m


def _sublane_multiple(dtype):
    # f32 -> 8, bf16 -> 16, int8/fp8 -> 32 (sub-32-bit packs along sublanes).
    return max(8, 32 // jnp.dtype(dtype).itemsize)


def _vmem_budget_bytes():
    """Generation-aware scoped-VMEM budget (bytes)."""
    cap = 64 * _MIB  # conservative (v7x-sized) fallback
    try:
        info = pltpu.get_tpu_info()
        cap = int(getattr(info, "vmem_capacity_bytes", cap))
    except Exception:
        pass
    if cap >= 100 * _MIB:          # v5e / v6e: 128 MiB per core
        return 96 * _MIB
    return max(16 * _MIB, min(cap * 3 // 4, 48 * _MIB))  # v7x: 64 MiB -> 48


# ---------------------------------------------------------------------------
# Kernels
# ---------------------------------------------------------------------------
def _ln_fullrow_kernel(x_ref, o_ref, *, d_true, eps):
    """One block = (tb, D): a batch of rows, the FULL feature dim."""
    inv_d = 1.0 / d_true
    x = x_ref[...].astype(jnp.float32)
    s = jnp.sum(x, axis=-1, keepdims=True)        # fused single sweep:
    sq = jnp.sum(x * x, axis=-1, keepdims=True)   # sum and sum-of-squares
    mean = s * inv_d
    var = jnp.maximum(sq * inv_d - mean * mean, 0.0)
    rstd = lax.rsqrt(var + eps)
    # Re-load/re-cast for the normalize so the f32 upcast used by the
    # reductions does not have to stay live across the whole body (keeps the
    # VMEM-temp working set ~2x tile instead of ~3-4x; helps v5e's 1 vst slot).
    o_ref[...] = ((x_ref[...].astype(jnp.float32) - mean) * rstd).astype(o_ref.dtype)


def _ln_stats_kernel(x_ref, mean_ref, rstd_ref, sum_sc, sq_sc,
                     *, d_true, d_int, dc, eps):
    """Chunked-D pass 1: accumulate sum / sum-of-squares over the D axis."""
    k = pl.program_id(1)

    @pl.when(k == 0)
    def _():
        sum_sc[...] = jnp.zeros_like(sum_sc)
        sq_sc[...] = jnp.zeros_like(sq_sc)

    x = x_ref[...].astype(jnp.float32)
    # Mask the ragged tail (global column >= true D) so partial-block garbage
    # never reaches the statistics.  jnp.where select -> NaN-safe.
    col = lax.broadcasted_iota(jnp.int32, x.shape, dimension=1) + k * dc
    x = jnp.where(col < d_int, x, 0.0)
    sum_sc[...] += jnp.sum(x, axis=-1, keepdims=True)
    sq_sc[...] += jnp.sum(x * x, axis=-1, keepdims=True)

    @pl.when(k == pl.num_programs(1) - 1)
    def _():
        inv_d = 1.0 / d_true
        mean = sum_sc[...] * inv_d
        var = jnp.maximum(sq_sc[...] * inv_d - mean * mean, 0.0)
        mean_ref[...] = mean
        rstd_ref[...] = lax.rsqrt(var + eps)


def _ln_apply_kernel(x_ref, mean_ref, rstd_ref, o_ref):
    """Chunked-D pass 2: apply (x - mean) * rstd per (tb, dc) tile."""
    x = x_ref[...].astype(jnp.float32)
    o_ref[...] = ((x - mean_ref[...]) * rstd_ref[...]).astype(o_ref.dtype)


# ---------------------------------------------------------------------------
# Wrapper
# ---------------------------------------------------------------------------
def _layer_norm_2d(x2d, eps, tile_cap_bytes=None):
    B, D = x2d.shape
    dtype = x2d.dtype
    itemsize = jnp.dtype(dtype).itemsize
    mult = _sublane_multiple(dtype)
    f32_factor = max(1, 4 // itemsize)   # bytes blow-up of the f32 upcast

    budget = _vmem_budget_bytes()
    if tile_cap_bytes is None:
        # Peak VMEM ~= 4*tile (in+out, double buffered) + ~3*tile*f32_factor
        # (f32 upcast + x*x + cast temporaries) + margin.
        tile_cap_bytes = max(_MIB, (budget - 2 * _MIB) // (4 + 3 * f32_factor))

    row_bytes = D * itemsize

    if row_bytes * mult <= tile_cap_bytes:
        # ---- single-pass path: full feature dim per block, many rows ------
        cap_rows = max(mult, (tile_cap_bytes // row_bytes) // mult * mult)
        tb = B if cap_rows >= B else cap_rows   # tb == B -> full-dim block OK
        grid_b = pl.cdiv(B, tb)

        tile_bytes = tb * row_bytes
        need = 4 * tile_bytes + 3 * tile_bytes * f32_factor + 2 * _MIB
        vmem_limit = int(min(max(need, 16 * _MIB), budget))

        kernel = functools.partial(_ln_fullrow_kernel,
                                   d_true=float(D), eps=float(eps))
        cost = pl.CostEstimate(flops=5 * B * D, transcendentals=B,
                               bytes_accessed=2 * B * D * itemsize)
        return pl.pallas_call(
            kernel,
            out_shape=jax.ShapeDtypeStruct((B, D), dtype),
            grid_spec=pltpu.PrefetchScalarGridSpec(
                num_scalar_prefetch=0,
                grid=(grid_b,),
                in_specs=[pl.BlockSpec((tb, D), lambda i: (i, 0))],
                out_specs=pl.BlockSpec((tb, D), lambda i: (i, 0)),
            ),
            compiler_params=pltpu.CompilerParams(
                dimension_semantics=("parallel",),
                vmem_limit_bytes=vmem_limit,
            ),
            cost_estimate=cost,
        )(x2d)

    # ---- chunked-D path (rare): reduce over an "arbitrary" grid axis ------
    tb = mult
    dc = max(128, (tile_cap_bytes // (tb * itemsize)) // 128 * 128)
    dc = min(dc, _round_up(D, 128))
    kd = pl.cdiv(D, dc)
    grid_b = pl.cdiv(B, tb)

    tile_bytes = tb * dc * itemsize
    need = 4 * tile_bytes + 3 * tile_bytes * f32_factor + 2 * _MIB
    vmem_limit = int(min(max(need, 16 * _MIB), budget))

    stats_kernel = functools.partial(_ln_stats_kernel, d_true=float(D),
                                     d_int=int(D), dc=int(dc), eps=float(eps))
    stats_cost = pl.CostEstimate(flops=3 * B * D, transcendentals=B,
                                 bytes_accessed=B * D * itemsize + 8 * B)
    mean, rstd = pl.pallas_call(
        stats_kernel,
        out_shape=(jax.ShapeDtypeStruct((B, 1), jnp.float32),
                   jax.ShapeDtypeStruct((B, 1), jnp.float32)),
        grid_spec=pltpu.PrefetchScalarGridSpec(
            num_scalar_prefetch=0,
            grid=(grid_b, kd),
            in_specs=[pl.BlockSpec((tb, dc), lambda i, k: (i, k))],
            out_specs=(pl.BlockSpec((tb, 1), lambda i, k: (i, 0)),
                       pl.BlockSpec((tb, 1), lambda i, k: (i, 0))),
            scratch_shapes=[pltpu.VMEM((tb, 1), jnp.float32),
                            pltpu.VMEM((tb, 1), jnp.float32)],
        ),
        compiler_params=pltpu.CompilerParams(
            dimension_semantics=("parallel", "arbitrary"),
            vmem_limit_bytes=vmem_limit,
        ),
        cost_estimate=stats_cost,
    )(x2d)

    apply_cost = pl.CostEstimate(flops=2 * B * D, transcendentals=0,
                                 bytes_accessed=2 * B * D * itemsize + 8 * B)
    return pl.pallas_call(
        _ln_apply_kernel,
        out_shape=jax.ShapeDtypeStruct((B, D), dtype),
        grid_spec=pltpu.PrefetchScalarGridSpec(
            num_scalar_prefetch=0,
            grid=(grid_b, kd),
            in_specs=[pl.BlockSpec((tb, dc), lambda i, k: (i, k)),
                      pl.BlockSpec((tb, 1), lambda i, k: (i, 0)),
                      pl.BlockSpec((tb, 1), lambda i, k: (i, 0))],
            out_specs=pl.BlockSpec((tb, dc), lambda i, k: (i, k)),
        ),
        compiler_params=pltpu.CompilerParams(
            dimension_semantics=("parallel", "parallel"),
            vmem_limit_bytes=vmem_limit,
        ),
        cost_estimate=apply_cost,
    )(x2d, mean, rstd)


def layer_normalization(x, eps=EPS, *, _tile_cap_bytes=None):
    """LayerNormalization.forward: normalize over all dims except batch."""
    orig_shape = x.shape
    B = int(orig_shape[0])
    D = 1
    for s in orig_shape[1:]:
        D *= int(s)
    x2d = x.reshape(B, D)
    out2d = _layer_norm_2d(x2d, eps, _tile_cap_bytes)
    return out2d.reshape(orig_shape)


# ---------------------------------------------------------------------------
# Self-test
# ---------------------------------------------------------------------------
if __name__ == "__main__":
    key = jax.random.PRNGKey(0)

    def ref_layernorm(x, eps=EPS):
        xf = x.reshape(x.shape[0], -1).astype(jnp.float32)
        mean = jnp.mean(xf, axis=-1, keepdims=True)
        var = jnp.mean((xf - mean) ** 2, axis=-1, keepdims=True)
        return ((xf - mean) / jnp.sqrt(var + eps)).reshape(x.shape).astype(x.dtype)

    k1, k2 = jax.random.split(key)

    # Main case: NCHW input, D = C*H*W = 1024 (multiple of 128).
    x = jax.random.normal(k1, (2, 4, 16, 16), dtype=jnp.float32)
    out = jax.block_until_ready(layer_normalization(x))
    assert jnp.max(jnp.abs(out - ref_layernorm(x))) < 1e-3, "fullrow mismatch"

    # Non-128-multiple feature dim: full-D block, masked lane-tail stores.
    x_odd = jax.random.normal(k2, (2, 3, 5, 7), dtype=jnp.float32)
    out_odd = jax.block_until_ready(layer_normalization(x_odd))
    assert jnp.max(jnp.abs(out_odd - ref_layernorm(x_odd))) < 1e-3, "tail mismatch"

    # Force the chunked-D (two-kernel) path with a tiny tile budget.
    out_chunk = jax.block_until_ready(
        layer_normalization(x, _tile_cap_bytes=8 * 256 * 4))
    assert jnp.max(jnp.abs(out_chunk - ref_layernorm(x))) < 1e-3, "chunked mismatch"

    print("KERNEL_OK")
</pallas_src>

<mosaic_0001>
module attributes {stable_mosaic.version = 11 : i64} {
  func.func @_ln_fullrow_kernel(%arg0: i32, %arg1: memref<2x1024xf32, #tpu.memory_space<vmem>>, %arg2: memref<2x1024xf32, #tpu.memory_space<vmem>>) attributes {dimension_semantics = [#tpu.dimension_semantics<parallel>], iteration_bounds = array<i64: 1>, scalar_prefetch = 0 : i64, scratch_operands = 0 : i64, tpu.core_type = #tpu.core_type<tc>, window_params = [{transform_indices = @transform_0, window_bounds = array<i64: 2, 1024>}, {transform_indices = @transform_1, window_bounds = array<i64: 2, 1024>}]} {
    %c0 = arith.constant 0 : index
    %c0_0 = arith.constant 0 : index
    %0 = vector.load %arg1[%c0, %c0_0] : memref<2x1024xf32, #tpu.memory_space<vmem>>, vector<2x1024xf32>
    %cst = arith.constant dense<0.000000e+00> : vector<2xf32>
    %1 = vector.multi_reduction <add>, %0, %cst [1] : vector<2x1024xf32> to vector<2xf32>
    %2 = vector.shape_cast %1 : vector<2xf32> to vector<2x1xf32>
    %3 = arith.mulf %0, %0 : vector<2x1024xf32>
    %cst_1 = arith.constant dense<0.000000e+00> : vector<2xf32>
    %4 = vector.multi_reduction <add>, %3, %cst_1 [1] : vector<2x1024xf32> to vector<2xf32>
    %5 = vector.shape_cast %4 : vector<2xf32> to vector<2x1xf32>
    %cst_2 = arith.constant 9.765625E-4 : f32
    %6 = vector.broadcast %cst_2 : f32 to vector<2x1xf32>
    %7 = arith.mulf %2, %6 : vector<2x1xf32>
    %cst_3 = arith.constant 9.765625E-4 : f32
    %8 = vector.broadcast %cst_3 : f32 to vector<2x1xf32>
    %9 = arith.mulf %5, %8 : vector<2x1xf32>
    %10 = arith.mulf %7, %7 : vector<2x1xf32>
    %11 = arith.subf %9, %10 : vector<2x1xf32>
    %cst_4 = arith.constant 0.000000e+00 : f32
    %12 = vector.broadcast %cst_4 : f32 to vector<2x1xf32>
    %13 = arith.maximumf %11, %12 : vector<2x1xf32>
    %cst_5 = arith.constant 9.99999997E-7 : f32
    %14 = vector.broadcast %cst_5 : f32 to vector<2x1xf32>
    %15 = arith.addf %13, %14 : vector<2x1xf32>
    %16 = math.rsqrt %15 : vector<2x1xf32>
    %c0_6 = arith.constant 0 : index
    %c0_7 = arith.constant 0 : index
    %17 = vector.load %arg1[%c0_6, %c0_7] : memref<2x1024xf32, #tpu.memory_space<vmem>>, vector<2x1024xf32>
    %18 = vector.broadcast %7 : vector<2x1xf32> to vector<2x1024xf32>
    %19 = arith.subf %17, %18 : vector<2x1024xf32>
    %20 = vector.broadcast %16 : vector<2x1xf32> to vector<2x1024xf32>
    %21 = arith.mulf %19, %20 : vector<2x1024xf32>
    %c0_8 = arith.constant 0 : index
    %c0_9 = arith.constant 0 : index
    %22 = vector.load %arg2[%c0_8, %c0_9] : memref<2x1024xf32, #tpu.memory_space<vmem>>, vector<2x1024xf32>
    tpu.vector_store %arg2[%c0_8, %c0_9], %21 {strides = array<i32>} : memref<2x1024xf32, #tpu.memory_space<vmem>>, vector<2x1024xf32>,
    return
  }
  func.func @transform_0(%arg0: i32) -> (i32, i32) {
    %c0_i32 = arith.constant 0 : i32
    %c0_i32_0 = arith.constant 0 : i32
    return %arg0, %c0_i32 : i32, i32
  }
  func.func @transform_1(%arg0: i32) -> (i32, i32) {
    %c0_i32 = arith.constant 0 : i32
    %c0_i32_0 = arith.constant 0 : i32
    return %arg0, %c0_i32 : i32, i32
  }
}

</mosaic_0001>

<llo_original>
// kernel: tpu_custom_call.1
$region0: #{tpu_custom_call.1}
  #allocation0 [shape = 'u32[]', space=smem, size = 0x4, offset = 0x4, fixed_abs, tag = 'smem constant byte address 0x4 - core index']
  #allocation1 [shape = 'u32[72,128]{1,0:T(1,128)}', space=vmem, size = 0x9000, scoped, tag = 'internal scratch']
  %s0 = inlined_call_operand.hbm [shape: f32[2,1024], index: 0, kind: input, shape index: {}]
  %s1 = inlined_call_operand.hbm [shape: f32[2,1024], index: 1, kind: output, shape index: {}]
  %s2 = sld [smem:[#allocation0]]
  $region18: #{tpu_custom_call.1} parent=0
    _
  %s4 = ssub.s32 1, %s2
  %s5 = scalar_select 0, %s4, %s2
  $region1: #{tpu_custom_call.1} parent=0
    #allocation2 [shape = 'u8[8192]{0}', space=vmem, size = 0x2000, scoped, tag = 'input window, operand 0, single buffered']
    #allocation3 [shape = 's32[1]{0}', space=sflag, size = 0x4, scoped, tag = 'scoped memory for tpu_custom_call.1']
    #allocation4 [shape = 's32[1]{0}', space=sflag, size = 0x4, scoped, tag = 'scoped memory for tpu_custom_call.1']
    #allocation5 [shape = 'u8[8192]{0}', space=vmem, size = 0x2000, scoped, tag = 'output window, operand 0, single buffered']
    %6 = vsyncpa [#allocation3], 0
    %7 = vsyncpa [#allocation4], 0
    // Predicated region
    $region2: #{tpu_custom_call.1} parent=1 // pred_check
      _
    $region3: #{tpu_custom_call.1} parent=1 // pred_check_branch
      %9 = sbr.rel (0) target = $region5
    $region4: #{tpu_custom_call.1} parent=1 // pred_region
      %11 = vsyncadd [#allocation3], 0
      %s13 = sshll.u32 %s0, 4
      %s14 = int_to_ptr.hbm [resolvable:$true] %s13
      %s15 = sshll.u32 [#allocation2], 4
      %s16 = int_to_ptr.vmem [resolvable:$true] %s15
      %18 = dma.hbm_to_vmem [thread:$0]  %s14, 256, %s16, [#allocation3]
    $region5: #{tpu_custom_call.1} parent=1 // pred_fallthru
      _
    // Predicated region
    $region6: #{tpu_custom_call.1} parent=1 // pred_check
      _
    $region7: #{tpu_custom_call.1} parent=1 // pred_check_branch
      %20 = sbr.rel (0) target = $region9
    $region8: #{tpu_custom_call.1} parent=1 // pred_region
      %22 = dma.done [#allocation3], 256
    $region9: #{tpu_custom_call.1} parent=1 // pred_fallthru
      _
    %v23 = vld [vmem:[#allocation2] sm:$0xff]
    %v24 = vld [vmem:[#allocation2 + $0x8] sm:$0xff]
    %27 = vst [vmem:[#allocation1] ss:$4 sm:$0xff] %v23
    %s28 = scalar_lea.vmem [#allocation1], 32
    %29 = vst [vmem:[%s28] ss:$4 sm:$0xff] %v24
    %v30 = vld.sshfl [vmem:[#allocation1] sm:$0xff pattern:$0x73625140]
    %v31 = vld.sshfl [vmem:[#allocation1 + $0x8] sm:$0xff pattern:$0x73625140]
    %v32 = vld.sshfl [vmem:[#allocation1 + $0x10] sm:$0xff pattern:$0x73625140]
    %v33 = vld.sshfl [vmem:[#allocation1 + $0x18] sm:$0xff pattern:$0x73625140]
    %v34 = vld.sshfl [vmem:[#allocation1 + $0x20] sm:$0xff pattern:$0x73625140]
    %v35 = vld.sshfl [vmem:[#allocation1 + $0x28] sm:$0xff pattern:$0x73625140]
    %v36 = vld.sshfl [vmem:[#allocation1 + $0x30] sm:$0xff pattern:$0x73625140]
    %v37 = vld.sshfl [vmem:[#allocation1 + $0x38] sm:$0xff pattern:$0x73625140]
    %vm46 = vcmask 1041408
    %v47 = vsel %vm46, %v30, 0.0
    %v48 = vsel %vm46, %v31, 0.0
    %v49 = vadd.f32 %v47, %v48
    %v50 = vsel %vm46, %v32, 0.0
    %v51 = vadd.f32 %v49, %v50
    %v52 = vsel %vm46, %v33, 0.0
    %v53 = vadd.f32 %v51, %v52
    %v54 = vsel %vm46, %v34, 0.0
    %v55 = vadd.f32 %v53, %v54
    %v56 = vsel %vm46, %v35, 0.0
    %v57 = vadd.f32 %v55, %v56
    %v58 = vsel %vm46, %v36, 0.0
    %v59 = vadd.f32 %v57, %v58
    %v60 = vsel %vm46, %v37, 0.0
    %v61 = vadd.f32 %v59, %v60
    %62 = vadd.xlane.f32.xlu0 %v61
    %v63 = vpop.xlane.xlu0 %62
    %v64 = vmul.f32 %v23, %v23
    %v65 = vmul.f32 %v24, %v24
    %68 = vst [vmem:[#allocation1] ss:$4 sm:$0xff] %v64
    %s69 = scalar_lea.vmem [#allocation1], 32
    %70 = vst [vmem:[%s69] ss:$4 sm:$0xff] %v65
    %v71 = vld.sshfl [vmem:[#allocation1] sm:$0xff pattern:$0x73625140]
    %v72 = vld.sshfl [vmem:[#allocation1 + $0x8] sm:$0xff pattern:$0x73625140]
    %v73 = vld.sshfl [vmem:[#allocation1 + $0x10] sm:$0xff pattern:$0x73625140]
    %v74 = vld.sshfl [vmem:[#allocation1 + $0x18] sm:$0xff pattern:$0x73625140]
    %v75 = vld.sshfl [vmem:[#allocation1 + $0x20] sm:$0xff pattern:$0x73625140]
    %v76 = vld.sshfl [vmem:[#allocation1 + $0x28] sm:$0xff pattern:$0x73625140]
    %v77 = vld.sshfl [vmem:[#allocation1 + $0x30] sm:$0xff pattern:$0x73625140]
    %v78 = vld.sshfl [vmem:[#allocation1 + $0x38] sm:$0xff pattern:$0x73625140]
    %v87 = vsel %vm46, %v71, 0.0
    %v88 = vsel %vm46, %v72, 0.0
    %v89 = vadd.f32 %v87, %v88
    %v90 = vsel %vm46, %v73, 0.0
    %v91 = vadd.f32 %v89, %v90
    %v92 = vsel %vm46, %v74, 0.0
    %v93 = vadd.f32 %v91, %v92
    %v94 = vsel %vm46, %v75, 0.0
    %v95 = vadd.f32 %v93, %v94
    %v96 = vsel %vm46, %v76, 0.0
    %v97 = vadd.f32 %v95, %v96
    %v98 = vsel %vm46, %v77, 0.0
    %v99 = vadd.f32 %v97, %v98
    %v100 = vsel %vm46, %v78, 0.0
    %v101 = vadd.f32 %v99, %v100
    %102 = vadd.xlane.f32.xlu0 %v101
    %v103 = vpop.xlane.xlu0 %102
    %v104 = vmul.f32 %v63, 0.0009765625
    %v105 = vmul.f32 %v103, 0.0009765625
    %v106 = vmul.f32 %v104, %v104
    %v107 = vsub.f32 %v105, %v106
    %v108 = vmax.f32 %v107, 0.0
    %v109 = vadd.f32 %v108, 1e-06
    %v110 = vrsqrt.pop %v109
    %v111 = vmul.f32 %v110, %v109
    %v112 = vmul.f32 %v111, %v110
    %v113 = vmul.f32 0.5, %v112
    %v114 = vsub.f32 1.5, %v113
    %v115 = vmul.f32 %v110, %v114
    %vm116 = vweird.f32 %v109
    %vm117 = vweird.f32 %v110
    %vm118 = vmor %vm116, %vm117
    %v119 = vsel %vm118, %v110, %v115
    %v122 = vunpack.c.l.s4 269488144
    %v123 = vunpack.c.0.s8 %v122
    %v124 = vperm.slane %v104, %v123
    %v126 = vsub.f32 %v23, %v124
    %v127 = vsub.f32 %v24, %v124
    %v130 = vunpack.c.l.s4 269488144
    %v131 = vunpack.c.0.s8 %v130
    %v132 = vperm.slane %v119, %v131
    %v134 = vmul.f32 %v126, %v132
    %v135 = vmul.f32 %v127, %v132
    %136 = vst [vmem:[#allocation5] sm:$0xff] %v134
    %137 = vst [vmem:[#allocation5 + $0x8] sm:$0xff] %v135
    // Predicated region
    $region10: #{tpu_custom_call.1} parent=1 // pred_check
      _
    $region11: #{tpu_custom_call.1} parent=1 // pred_check_branch
      %139 = sbr.rel (0) target = $region13
    $region12: #{tpu_custom_call.1} parent=1 // pred_region
      %141 = vsyncadd [#allocation4], 0
      %s143 = sshll.u32 [#allocation5], 4
      %s144 = int_to_ptr.vmem [resolvable:$true] %s143
      %s145 = sshll.u32 %s1, 4
      %s146 = int_to_ptr.hbm [resolvable:$true] %s145
      %148 = dma.vmem_to_hbm [thread:$0]  %s144, 256, %s146, [#allocation4]
    $region13: #{tpu_custom_call.1} parent=1 // pred_fallthru
      _
    // Predicated region
    $region14: #{tpu_custom_call.1} parent=1 // pred_check
      _
    $region15: #{tpu_custom_call.1} parent=1 // pred_check_branch
      %150 = sbr.rel (0) target = $region17
    $region16: #{tpu_custom_call.1} parent=1 // pred_region
      %152 = dma.done [#allocation4], 256
    $region17: #{tpu_custom_call.1} parent=1 // pred_fallthru
      _
    %153 = vsyncpa [#allocation3], 1
    %154 = vsyncpa [#allocation4], 1

</llo_original>
